<compile_context>
chip_gen: v5e
topology: v5e:2x2
jax: 0.10.0
libtpu: 0.0.40
codegen_flags: <defaults>
</compile_context>

<pallas_src>
import math

import jax
import jax.numpy as jnp
from jax.experimental import pallas as pl
from jax.experimental.pallas import tpu as pltpu


_VMEM_LIMIT_BYTES = 32 * 1024 * 1024            # safe on every generation incl. v7x (64 MiB phys)
_VMEM_BUDGET_BYTES = int(0.75 * _VMEM_LIMIT_BYTES)   # working-set budget tied to the actual limit
_TARGET_BLOCK_BYTES = 2 * 1024 * 1024            # ~1-4 MiB payload keeps the pipeline DMA-dominated
_SUBLANE_BY_ITEMSIZE = {4: 8, 2: 16, 1: 32}      # sub-32-bit dtypes pack along sublanes


def make_positional_encoding(d_model: int, max_seq_length: int = 5000,
                             dtype=jnp.float32) -> jnp.ndarray:
    """Sinusoidal PE table matching the PyTorch buffer."""
    assert d_model % 2 == 0, "sinusoidal positional encoding requires an even d_model"
    position = jnp.arange(0, max_seq_length, dtype=jnp.float32)[:, None]          # (L, 1)
    div_term = jnp.exp(
        jnp.arange(0, d_model, 2, dtype=jnp.float32) * (-math.log(10000.0) / d_model)
    )                                                                              # (D/2,)
    angles = position * div_term                                                   # (L, D/2)
    pe = jnp.zeros((max_seq_length, d_model), dtype=jnp.float32)
    pe = pe.at[:, 0::2].set(jnp.sin(angles))
    pe = pe.at[:, 1::2].set(jnp.cos(angles))
    return pe.astype(dtype)                                                        # (L, D)


# ---------------------------------------------------------------------------
# Kernel bodies
# ---------------------------------------------------------------------------

def _pe_add_kernel_per_batch(x_ref, pe_ref, o_ref):
    # (TS, D) tiles, batch dim squeezed -> plain 2-D VPU add.
    o_ref[...] = x_ref[...] + pe_ref[...]


def _pe_add_kernel_whole_batch(x_ref, pe_ref, o_ref):
    # x/o: (B, TS, D); pe: (TS, D) broadcast over the batch dim.
    o_ref[...] = x_ref[...] + pe_ref[...][None]


# ---------------------------------------------------------------------------
# Tiling helpers
# ---------------------------------------------------------------------------

def _round_up(v: int, m: int) -> int:
    return ((v + m - 1) // m) * m


def _choose_seq_tile(s_eff: int, d_eff: int, itemsize: int,
                     batch_rows: int, sublane: int) -> int:
    """Byte-sized seq tile: ~_TARGET_BLOCK_BYTES of payload per block, capped so
    the double-buffered working set stays under the VMEM budget."""
    row_bytes = d_eff * itemsize
    # Live VMEM per grid step: x + out double-buffered carry `batch_rows` batch
    # rows each, pe double-buffered carries 1  ->  (4*B_blk + 2) rows per seq row.
    live_row_bytes = (4 * batch_rows + 2) * row_bytes
    ts_budget = max(sublane, _VMEM_BUDGET_BYTES // live_row_bytes)
    ts_target = max(sublane, _TARGET_BLOCK_BYTES // (batch_rows * row_bytes))
    ts = min(ts_budget, ts_target)
    if ts >= s_eff:
        return s_eff                       # full seq extent (exempt from 8-divisibility)
    return max(sublane, (ts // sublane) * sublane)


# ---------------------------------------------------------------------------
# Forward wrapper
# ---------------------------------------------------------------------------

def positional_encoding_forward(x: jnp.ndarray, pe: jnp.ndarray, *,
                                seq_tile: int | None = None,
                                whole_batch: bool | None = None) -> jnp.ndarray:
    """x: (B, S, D); pe: (L, D). Returns x + pe[:S] broadcast over B (dtype of x)."""
    B, S, D = x.shape
    L, Dp = pe.shape
    assert Dp == D, "d_model mismatch between x and pe"
    assert S <= L, "sequence longer than the positional-encoding table"

    itemsize = x.dtype.itemsize
    sublane = _SUBLANE_BY_ITEMSIZE.get(itemsize, 8)

    # ---- Lane-dense packing: fold k seq rows into the last dim so it becomes a
    # multiple of 128 (turns masked vst.msk partial stores into unmasked vst).
    fold = 1
    if D % 128 != 0:
        k = 128 // math.gcd(D, 128)
        if S % k == 0:
            fold = k
    s_eff, d_eff = S // fold, D * fold

    # ---- pe: cast once to x.dtype; fold if needed. If no fold and dtypes match,
    # pass the full table and window it via index_map (no wrapper-side copy).
    if fold > 1:
        pe_in = pe[:S].astype(x.dtype).reshape(s_eff, d_eff)
    elif pe.dtype != x.dtype:
        pe_in = pe[:S].astype(x.dtype)         # slice-then-cast: only O(S*D) work
    else:
        pe_in = pe
    x_in = x.reshape(B, s_eff, d_eff) if fold > 1 else x

    # ---- Layout choice: take the whole batch per block whenever even a minimal
    # (B, sublane, D) working set fits the budget (merges B small DMAs into one
    # strided DMA per step and cuts grid steps by B).
    min_wb_bytes = (4 * B + 2) * min(sublane, s_eff) * d_eff * itemsize
    if whole_batch is None:
        whole_batch = min_wb_bytes <= _VMEM_BUDGET_BYTES
    batch_rows = B if whole_batch else 1

    ts = seq_tile if seq_tile is not None else _choose_seq_tile(
        s_eff, d_eff, itemsize, batch_rows, sublane)
    num_seq_tiles = pl.cdiv(s_eff, ts)

    # ---- v7x megacore: guarantee >=2 steps along a parallel axis so both
    # TensorCores get work (relevant when the grid would otherwise be a single step).
    single_step = (num_seq_tiles == 1) and (whole_batch or B == 1)
    if seq_tile is None and single_step and s_eff >= 2 * sublane:
        ts = _round_up(pl.cdiv(s_eff, 2), sublane)
        num_seq_tiles = pl.cdiv(s_eff, ts)

    if whole_batch:
        grid = (num_seq_tiles,)
        kernel = _pe_add_kernel_whole_batch
        x_spec = pl.BlockSpec((B, ts, d_eff), lambda si: (0, si, 0))
        pe_spec = pl.BlockSpec((ts, d_eff), lambda si: (si, 0))
        out_spec = pl.BlockSpec((B, ts, d_eff), lambda si: (0, si, 0))
        semantics = ("parallel",)
    else:
        # seq axis outermost -> the pe tile's block index is constant across the
        # inner batch axis, so it stays resident (pe HBM traffic is O(S*D)).
        grid = (num_seq_tiles, B)
        kernel = _pe_add_kernel_per_batch
        x_spec = pl.BlockSpec((pl.Squeezed(), ts, d_eff), lambda si, b: (b, si, 0))
        pe_spec = pl.BlockSpec((ts, d_eff), lambda si, b: (si, 0))
        out_spec = pl.BlockSpec((pl.Squeezed(), ts, d_eff), lambda si, b: (b, si, 0))
        semantics = ("parallel", "parallel")

    out = pl.pallas_call(
        kernel,
        out_shape=jax.ShapeDtypeStruct((B, s_eff, d_eff), x.dtype),
        grid_spec=pltpu.PrefetchScalarGridSpec(
            num_scalar_prefetch=0,
            grid=grid,
            in_specs=[x_spec, pe_spec],
            out_specs=out_spec,
        ),
        compiler_params=pltpu.CompilerParams(
            dimension_semantics=semantics,
            vmem_limit_bytes=_VMEM_LIMIT_BYTES,
        ),
    )(x_in, pe_in)

    return out.reshape(B, S, D) if fold > 1 else out


# ---------------------------------------------------------------------------
# Self-test
# ---------------------------------------------------------------------------

if __name__ == "__main__":
    key = jax.random.PRNGKey(0)
    k0, k1, k2, k3 = jax.random.split(key, 4)
    MAX_SEQ = 64

    # 1) Small shape, narrow d_model (D=32) -> lane-dense fold (k=4), whole-batch block.
    B, S, D = 2, 8, 32
    x = jax.random.normal(k0, (B, S, D), dtype=jnp.float32)
    pe = make_positional_encoding(D, MAX_SEQ)
    out = jax.block_until_ready(positional_encoding_forward(x, pe))
    ref = x + pe[None, :S, :]
    assert out.shape == (B, S, D)
    assert jnp.allclose(out, ref, atol=1e-6, rtol=1e-6)

    # 2) bf16 input with f32 table -> pe cast to bf16 in the wrapper, bf16 VALU add.
    B2, S2, D2 = 2, 20, 128
    x2 = jax.random.normal(k1, (B2, S2, D2), dtype=jnp.float32).astype(jnp.bfloat16)
    pe2 = make_positional_encoding(D2, MAX_SEQ)
    out2 = jax.block_until_ready(positional_encoding_forward(x2, pe2))
    ref2 = x2 + pe2[None, :S2, :].astype(jnp.bfloat16)
    assert out2.shape == (B2, S2, D2)
    assert jnp.allclose(out2.astype(jnp.float32), ref2.astype(jnp.float32),
                        atol=1e-2, rtol=1e-2)

    # 3) Forced per-batch layout with a ragged final seq tile (exercises the
    #    (seq, batch) grid, pe residency across the batch axis, masked boundary).
    x3 = jax.random.normal(k2, (B2, S2, D2), dtype=jnp.float32)
    pe3 = make_positional_encoding(D2, MAX_SEQ)
    out3 = jax.block_until_ready(
        positional_encoding_forward(x3, pe3, seq_tile=8, whole_batch=False))
    ref3 = x3 + pe3[None, :S2, :]
    assert out3.shape == (B2, S2, D2)
    assert jnp.allclose(out3, ref3, atol=1e-6, rtol=1e-6)

    # 4) B=1 with enough seq rows -> the >=2-parallel-step split kicks in.
    B4, S4, D4 = 1, 64, 128
    x4 = jax.random.normal(k3, (B4, S4, D4), dtype=jnp.float32)
    pe4 = make_positional_encoding(D4, MAX_SEQ)
    out4 = jax.block_until_ready(positional_encoding_forward(x4, pe4))
    ref4 = x4 + pe4[None, :S4, :]
    assert out4.shape == (B4, S4, D4)
    assert jnp.allclose(out4, ref4, atol=1e-6, rtol=1e-6)

    print("KERNEL_OK")
</pallas_src>

<mosaic_0001>
module attributes {stable_mosaic.version = 11 : i64} {
  func.func @_pe_add_kernel_whole_batch(%arg0: i32, %arg1: memref<2x2x128xf32, #tpu.memory_space<vmem>>, %arg2: memref<2x128xf32, #tpu.memory_space<vmem>>, %arg3: memref<2x2x128xf32, #tpu.memory_space<vmem>>) attributes {dimension_semantics = [#tpu.dimension_semantics<parallel>], iteration_bounds = array<i64: 1>, scalar_prefetch = 0 : i64, scratch_operands = 0 : i64, tpu.core_type = #tpu.core_type<tc>, window_params = [{transform_indices = @transform_0, window_bounds = array<i64: 2, 2, 128>}, {transform_indices = @transform_1, window_bounds = array<i64: 2, 128>}, {transform_indices = @transform_2, window_bounds = array<i64: 2, 2, 128>}]} {
    %c0 = arith.constant 0 : index
    %c0_0 = arith.constant 0 : index
    %c0_1 = arith.constant 0 : index
    %0 = vector.load %arg1[%c0, %c0_0, %c0_1] : memref<2x2x128xf32, #tpu.memory_space<vmem>>, vector<2x2x128xf32>
    %c0_2 = arith.constant 0 : index
    %c0_3 = arith.constant 0 : index
    %1 = vector.load %arg2[%c0_2, %c0_3] : memref<2x128xf32, #tpu.memory_space<vmem>>, vector<2x128xf32>
    %2 = vector.shape_cast %1 : vector<2x128xf32> to vector<1x2x128xf32>
    %3 = vector.broadcast %2 : vector<1x2x128xf32> to vector<2x2x128xf32>
    %4 = arith.addf %0, %3 : vector<2x2x128xf32>
    %c0_4 = arith.constant 0 : index
    %c0_5 = arith.constant 0 : index
    %c0_6 = arith.constant 0 : index
    %5 = vector.load %arg3[%c0_4, %c0_5, %c0_6] : memref<2x2x128xf32, #tpu.memory_space<vmem>>, vector<2x2x128xf32>
    tpu.vector_store %arg3[%c0_4, %c0_5, %c0_6], %4 {strides = array<i32>} : memref<2x2x128xf32, #tpu.memory_space<vmem>>, vector<2x2x128xf32>,
    return
  }
  func.func @transform_0(%arg0: i32) -> (i32, i32, i32) {
    %c0_i32 = arith.constant 0 : i32
    %c0_i32_0 = arith.constant 0 : i32
    %c0_i32_1 = arith.constant 0 : i32
    return %c0_i32, %arg0, %c0_i32_0 : i32, i32, i32
  }
  func.func @transform_1(%arg0: i32) -> (i32, i32) {
    %c0_i32 = arith.constant 0 : i32
    %c0_i32_0 = arith.constant 0 : i32
    return %arg0, %c0_i32 : i32, i32
  }
  func.func @transform_2(%arg0: i32) -> (i32, i32, i32) {
    %c0_i32 = arith.constant 0 : i32
    %c0_i32_0 = arith.constant 0 : i32
    %c0_i32_1 = arith.constant 0 : i32
    return %c0_i32, %arg0, %c0_i32_0 : i32, i32, i32
  }
}

</mosaic_0001>

<llo_original>
// kernel: tpu_custom_call.1
$region0: #{tpu_custom_call.1}
  #allocation0 [shape = 'u32[]', space=smem, size = 0x4, offset = 0x4, fixed_abs, tag = 'smem constant byte address 0x4 - core index']
  #allocation1 [shape = 'u32[72,128]{1,0:T(1,128)}', space=vmem, size = 0x9000, scoped, tag = 'internal scratch']
  %s0 = inlined_call_operand.hbm [shape: f32[2,2,128], index: 0, kind: input, shape index: {}]
  %s1 = inlined_call_operand.hbm [shape: f32[2,128], index: 1, kind: input, shape index: {}]
  %s2 = inlined_call_operand.hbm [shape: f32[2,2,128], index: 2, kind: output, shape index: {}]
  %s3 = sld [smem:[#allocation0]]
  $region26: #{tpu_custom_call.1} parent=0
    _
  %s5 = ssub.s32 1, %s3
  %s6 = scalar_select 0, %s5, %s3
  $region1: #{tpu_custom_call.1} parent=0
    #allocation2 [shape = 'u8[2048]{0}', space=vmem, size = 0x800, scoped, tag = 'input window, operand 0, single buffered']
    #allocation3 [shape = 's32[1]{0}', space=sflag, size = 0x4, scoped, tag = 'scoped memory for tpu_custom_call.1']
    #allocation4 [shape = 's32[1]{0}', space=sflag, size = 0x4, scoped, tag = 'scoped memory for tpu_custom_call.1']
    #allocation5 [shape = 'u8[1024]{0}', space=vmem, size = 0x400, scoped, tag = 'input window, operand 1, single buffered']
    #allocation6 [shape = 's32[1]{0}', space=sflag, size = 0x4, scoped, tag = 'scoped memory for tpu_custom_call.1']
    #allocation7 [shape = 'u8[2048]{0}', space=vmem, size = 0x800, scoped, tag = 'output window, operand 0, single buffered']
    %7 = vsyncpa [#allocation3], 0
    %8 = vsyncpa [#allocation6], 0
    %9 = vsyncpa [#allocation4], 0
    // Predicated region
    $region2: #{tpu_custom_call.1} parent=1 // pred_check
      _
    $region3: #{tpu_custom_call.1} parent=1 // pred_check_branch
      %11 = sbr.rel (0) target = $region5
    $region4: #{tpu_custom_call.1} parent=1 // pred_region
      %13 = vsyncadd [#allocation3], 0
      %s14 = sshll.u32 %s0, 4
      %s15 = int_to_ptr.hbm [resolvable:$true] %s14
      %s16 = sshll.u32 [#allocation2], 4
      %s17 = int_to_ptr.vmem [resolvable:$true] %s16
      %22 = dma.hbm_to_vmem [thread:$0]  %s15, 64, %s17, [#allocation3], 32, 32, 2
    $region5: #{tpu_custom_call.1} parent=1 // pred_fallthru
      _
    // Predicated region
    $region6: #{tpu_custom_call.1} parent=1 // pred_check
      _
    $region7: #{tpu_custom_call.1} parent=1 // pred_check_branch
      %24 = sbr.rel (0) target = $region9
    $region8: #{tpu_custom_call.1} parent=1 // pred_region
      %26 = vsyncadd [#allocation6], 0
      %s28 = sshll.u32 %s1, 4
      %s29 = int_to_ptr.hbm [resolvable:$true] %s28
      %s30 = sshll.u32 [#allocation5], 4
      %s31 = int_to_ptr.vmem [resolvable:$true] %s30
      %33 = dma.hbm_to_vmem [thread:$0]  %s29, 32, %s31, [#allocation6]
    $region9: #{tpu_custom_call.1} parent=1 // pred_fallthru
      _
    // Predicated region
    $region10: #{tpu_custom_call.1} parent=1 // pred_check
      _
    $region11: #{tpu_custom_call.1} parent=1 // pred_check_branch
      %35 = sbr.rel (0) target = $region13
    $region12: #{tpu_custom_call.1} parent=1 // pred_region
      %37 = dma.done [#allocation3], 64
    $region13: #{tpu_custom_call.1} parent=1 // pred_fallthru
      _
    // Predicated region
    $region14: #{tpu_custom_call.1} parent=1 // pred_check
      _
    $region15: #{tpu_custom_call.1} parent=1 // pred_check_branch
      %39 = sbr.rel (0) target = $region17
    $region16: #{tpu_custom_call.1} parent=1 // pred_region
      %41 = dma.done [#allocation6], 32
    $region17: #{tpu_custom_call.1} parent=1 // pred_fallthru
      _
    %v42 = vld [vmem:[#allocation2] sm:$0x3]
    %v43 = vld [vmem:[#allocation2 + $0x2] sm:$0x3]
    %v44 = vld [vmem:[#allocation5] sm:$0x3]
    %v45 = vadd.f32 %v42, %v44
    %v46 = vadd.f32 %v43, %v44
    %47 = vst [vmem:[#allocation7] sm:$0x3] %v45
    %48 = vst [vmem:[#allocation7 + $0x2] sm:$0x3] %v46
    // Predicated region
    $region18: #{tpu_custom_call.1} parent=1 // pred_check
      _
    $region19: #{tpu_custom_call.1} parent=1 // pred_check_branch
      %50 = sbr.rel (0) target = $region21
    $region20: #{tpu_custom_call.1} parent=1 // pred_region
      %52 = vsyncadd [#allocation4], 0
      %s53 = sshll.u32 [#allocation7], 4
      %s54 = int_to_ptr.vmem [resolvable:$true] %s53
      %s55 = sshll.u32 %s2, 4
      %s56 = int_to_ptr.hbm [resolvable:$true] %s55
      %61 = dma.vmem_to_hbm [thread:$0]  %s54, 64, %s56, [#allocation4], 32, 32, 2
    $region21: #{tpu_custom_call.1} parent=1 // pred_fallthru
      _
    // Predicated region
    $region22: #{tpu_custom_call.1} parent=1 // pred_check
      _
    $region23: #{tpu_custom_call.1} parent=1 // pred_check_branch
      %63 = sbr.rel (0) target = $region25
    $region24: #{tpu_custom_call.1} parent=1 // pred_region
      %65 = dma.done [#allocation4], 64
    $region25: #{tpu_custom_call.1} parent=1 // pred_fallthru
      _
    %66 = vsyncpa [#allocation3], 1
    %67 = vsyncpa [#allocation6], 1
    %68 = vsyncpa [#allocation4], 1

</llo_original>
